<compile_context>
chip_gen: v7x
topology: tpu7x:2x2x1
jax: 0.10.0
libtpu: 0.0.40
codegen_flags: <defaults>
</compile_context>

<pallas_src>
import functools
import math

import jax
import jax.numpy as jnp
from jax.experimental import pallas as pl
from jax.experimental.pallas import tpu as pltpu


def _round_up(x, m):
    return ((x + m - 1) // m) * m


def _cdiv(a, b):
    return (a + b - 1) // b


def _tpu_hw():
    """Best-effort (vmem_capacity_bytes, tensorcores_per_chip)."""
    vmem_cap = 64 * 1024 * 1024          # conservative default (v7x per-TC VMEM)
    num_cores = 1
    try:
        info = pltpu.get_tpu_info()
        vmem_cap = int(getattr(info, "vmem_capacity_bytes", vmem_cap))
    except Exception:
        pass
    try:
        kind = str(getattr(jax.local_devices()[0], "device_kind", "")).lower()
        if "v7" in kind or "tpu7" in kind or "7x" in kind:
            num_cores = 2                # v7x: 2 TensorCores per chip
    except Exception:
        pass
    return vmem_cap, num_cores


def _layernorm_kernel(x_ref, scale_ref, bias_ref, o_ref, *,
                      eps, hidden, hidden_pad, approx_recip):
    # x_ref: (block_rows, hidden_pad); scale_ref / bias_ref: (1, hidden_pad) f32
    x = x_ref[...].astype(jnp.float32)

    if hidden_pad != hidden:
        lane = jax.lax.broadcasted_iota(jnp.int32, x.shape, dimension=1)
        xv = jnp.where(lane < hidden, x, 0.0)     # mask once for the statistics
    else:
        xv = x

    # Per-row mean and unbiased variance from sum / sum-of-squares.
    s1 = jnp.sum(xv, axis=-1, keepdims=True)
    s2 = jnp.sum(xv * xv, axis=-1, keepdims=True)
    mean = s1 * (1.0 / hidden)
    var = (s2 - s1 * mean) * (1.0 / (hidden - 1))   # torch.std: divide by N-1
    var = jnp.maximum(var, 0.0)                     # guard tiny cancellation
    std = jnp.sqrt(var)

    # Per-row reciprocal (block_rows x 1) instead of a full-tile divide.
    # approx=False keeps exact parity with the reference divide; approx=True
    # pushes it onto the otherwise-idle EUP if looser numerics are acceptable.
    inv = pl.reciprocal(std + eps, approx=approx_recip)

    # Padded lanes (if any) are sliced off by the wrapper — no second mask.
    out = (x - mean) * inv * scale_ref[...] + bias_ref[...]
    o_ref[...] = out.astype(o_ref.dtype)


def layer_norm(x, scale, bias, eps=1e-6, block_rows=None,
               vmem_limit_bytes=None, approx_reciprocal=False):
    """x: [..., hidden]; scale, bias: [hidden]."""
    orig_shape = x.shape
    hidden = orig_shape[-1]
    assert hidden > 1, "hidden must be > 1 (unbiased std divides by N-1)"

    rows = math.prod(orig_shape[:-1]) if len(orig_shape) > 1 else 1
    x2 = x.reshape(rows, hidden)

    # Lane-dense stores: pad hidden only when it is not already 128-aligned
    # (real transformer widths pay nothing; no row padding in any case).
    hidden_pad = _round_up(hidden, 128)
    lane_padded = hidden_pad != hidden
    if lane_padded:
        x2 = jnp.pad(x2, ((0, 0), (0, hidden_pad - hidden)))

    itemsize = jnp.dtype(x.dtype).itemsize
    # Packed sublane tile of the I/O dtype: 8 f32 / 16 bf16 / 32 int8-fp8.
    sublane = max(8, 32 // itemsize)

    vmem_cap, num_cores = _tpu_hw()
    if vmem_limit_bytes is None:
        vmem_limit_bytes = min(vmem_cap - 8 * 1024 * 1024, 100 * 1024 * 1024)

    if block_rows is None:
        # in + out, double-buffered, plus ~3 f32 full-tile temporaries
        # (x.astype(f32), the normalized diff, the f32 out) per live block.
        per_row = 2 * 2 * hidden_pad * itemsize + 3 * hidden_pad * 4
        tile_budget = (3 * vmem_cap) // 8          # ~37.5% of VMEM capacity
        block_rows = max(sublane, tile_budget // per_row)
    block_rows = max(sublane, (block_rows // sublane) * sublane)
    block_rows = min(block_rows, 4096)
    # Never bigger than the (sublane-rounded) row count.
    block_rows = min(block_rows, _round_up(rows, sublane))
    # Only multi-TC chips (v7x) benefit from keeping several grid steps alive;
    # single-TC v5e/v6e simply take the largest tile that fits.
    if num_cores > 1:
        min_steps = 2 * num_cores
        block_rows = min(block_rows,
                         max(sublane, _round_up(_cdiv(rows, min_steps), sublane)))

    grid = (_cdiv(rows, block_rows),)   # partial last block handled by Pallas

    # Cast params to f32 once; constant index_map keeps them VMEM-resident.
    scale2 = scale.astype(jnp.float32).reshape(1, hidden)
    bias2 = bias.astype(jnp.float32).reshape(1, hidden)
    if lane_padded:
        scale2 = jnp.pad(scale2, ((0, 0), (0, hidden_pad - hidden)))
        bias2 = jnp.pad(bias2, ((0, 0), (0, hidden_pad - hidden)))

    kernel = functools.partial(
        _layernorm_kernel, eps=eps, hidden=hidden, hidden_pad=hidden_pad,
        approx_recip=approx_reciprocal)

    out = pl.pallas_call(
        kernel,
        out_shape=jax.ShapeDtypeStruct((rows, hidden_pad), x.dtype),
        grid_spec=pltpu.PrefetchScalarGridSpec(
            num_scalar_prefetch=0,
            grid=grid,
            in_specs=[
                pl.BlockSpec((block_rows, hidden_pad), lambda i: (i, 0)),
                pl.BlockSpec((1, hidden_pad), lambda i: (0, 0)),
                pl.BlockSpec((1, hidden_pad), lambda i: (0, 0)),
            ],
            out_specs=pl.BlockSpec((block_rows, hidden_pad), lambda i: (i, 0)),
        ),
        compiler_params=pltpu.CompilerParams(
            dimension_semantics=("parallel",),
            vmem_limit_bytes=int(vmem_limit_bytes),
        ),
    )(x2, scale2, bias2)

    if lane_padded:
        out = out[:, :hidden]
    return out.reshape(orig_shape)


if __name__ == "__main__":
    key = jax.random.PRNGKey(0)
    batch, seq, hidden = 2, 8, 32

    x = jax.random.normal(key, (batch, seq, hidden), dtype=jnp.float32)

    # Deterministic parameter init matching nn.Parameter(torch.ones / torch.zeros)
    scale = jnp.ones((hidden,), dtype=jnp.float32)
    bias = jnp.zeros((hidden,), dtype=jnp.float32)

    out = layer_norm(x, scale, bias, eps=1e-6)
    out = jax.block_until_ready(out)

    # Sanity check against a pure-JAX reference (torch semantics: unbiased std,
    # eps added to std, not to variance).
    mean = jnp.mean(x, axis=-1, keepdims=True)
    std = jnp.std(x, axis=-1, keepdims=True, ddof=1)
    ref = (x - mean) / (std + 1e-6) * scale + bias
    assert jnp.allclose(out, ref, atol=1e-5, rtol=1e-5), "mismatch vs reference"

    print("KERNEL_OK")
</pallas_src>

<mosaic_0001>
module attributes {stable_mosaic.version = 11 : i64} {
  func.func @_layernorm_kernel(%arg0: i32, %arg1: memref<16x128xf32, #tpu.memory_space<vmem>>, %arg2: memref<1x128xf32, #tpu.memory_space<vmem>>, %arg3: memref<1x128xf32, #tpu.memory_space<vmem>>, %arg4: memref<16x128xf32, #tpu.memory_space<vmem>>) attributes {dimension_semantics = [#tpu.dimension_semantics<parallel>], iteration_bounds = array<i64: 1>, scalar_prefetch = 0 : i64, scratch_operands = 0 : i64, tpu.core_type = #tpu.core_type<tc>, window_params = [{transform_indices = @transform_0, window_bounds = array<i64: 16, 128>}, {pipeline_mode = #tpu.pipeline_mode<synchronous>, transform_indices = @transform_1, window_bounds = array<i64: 1, 128>}, {pipeline_mode = #tpu.pipeline_mode<synchronous>, transform_indices = @transform_2, window_bounds = array<i64: 1, 128>}, {transform_indices = @transform_3, window_bounds = array<i64: 16, 128>}]} {
    %c0 = arith.constant 0 : index
    %c0_0 = arith.constant 0 : index
    %0 = vector.load %arg1[%c0, %c0_0] : memref<16x128xf32, #tpu.memory_space<vmem>>, vector<16x128xf32>
    %1 = tpu.iota {dimensions = array<i32: 1>} : vector<16x128xi32>
    %c32_i32 = arith.constant 32 : i32
    %2 = vector.broadcast %c32_i32 : i32 to vector<16x128xi32>
    %3 = arith.cmpi slt, %1, %2 : vector<16x128xi32>
    %cst = arith.constant 0.000000e+00 : f32
    %4 = vector.broadcast %cst : f32 to vector<16x128xf32>
    %5 = arith.select %3, %0, %4 : vector<16x128xi1>, vector<16x128xf32>
    %cst_1 = arith.constant dense<0.000000e+00> : vector<16xf32>
    %6 = vector.multi_reduction <add>, %5, %cst_1 [1] : vector<16x128xf32> to vector<16xf32>
    %7 = vector.shape_cast %6 : vector<16xf32> to vector<16x1xf32>
    %8 = arith.mulf %5, %5 : vector<16x128xf32>
    %cst_2 = arith.constant dense<0.000000e+00> : vector<16xf32>
    %9 = vector.multi_reduction <add>, %8, %cst_2 [1] : vector<16x128xf32> to vector<16xf32>
    %10 = vector.shape_cast %9 : vector<16xf32> to vector<16x1xf32>
    %cst_3 = arith.constant 3.125000e-02 : f32
    %11 = vector.broadcast %cst_3 : f32 to vector<16x1xf32>
    %12 = arith.mulf %7, %11 : vector<16x1xf32>
    %13 = arith.mulf %7, %12 : vector<16x1xf32>
    %14 = arith.subf %10, %13 : vector<16x1xf32>
    %cst_4 = arith.constant 0.0322580636 : f32
    %15 = vector.broadcast %cst_4 : f32 to vector<16x1xf32>
    %16 = arith.mulf %14, %15 : vector<16x1xf32>
    %cst_5 = arith.constant 0.000000e+00 : f32
    %17 = vector.broadcast %cst_5 : f32 to vector<16x1xf32>
    %18 = arith.maximumf %16, %17 : vector<16x1xf32>
    %19 = math.sqrt %18 : vector<16x1xf32>
    %cst_6 = arith.constant 9.99999997E-7 : f32
    %20 = vector.broadcast %cst_6 : f32 to vector<16x1xf32>
    %21 = arith.addf %19, %20 : vector<16x1xf32>
    %22 = tpu.reciprocal %21 : vector<16x1xf32> -> vector<16x1xf32>
    %23 = vector.broadcast %12 : vector<16x1xf32> to vector<16x128xf32>
    %24 = arith.subf %0, %23 : vector<16x128xf32>
    %25 = vector.broadcast %22 : vector<16x1xf32> to vector<16x128xf32>
    %26 = arith.mulf %24, %25 : vector<16x128xf32>
    %c0_7 = arith.constant 0 : index
    %c0_8 = arith.constant 0 : index
    %27 = vector.load %arg2[%c0_7, %c0_8] : memref<1x128xf32, #tpu.memory_space<vmem>>, vector<1x128xf32>
    %28 = vector.broadcast %27 : vector<1x128xf32> to vector<16x128xf32>
    %29 = arith.mulf %26, %28 : vector<16x128xf32>
    %c0_9 = arith.constant 0 : index
    %c0_10 = arith.constant 0 : index
    %30 = vector.load %arg3[%c0_9, %c0_10] : memref<1x128xf32, #tpu.memory_space<vmem>>, vector<1x128xf32>
    %31 = vector.broadcast %30 : vector<1x128xf32> to vector<16x128xf32>
    %32 = arith.addf %29, %31 : vector<16x128xf32>
    %c0_11 = arith.constant 0 : index
    %c0_12 = arith.constant 0 : index
    %33 = vector.load %arg4[%c0_11, %c0_12] : memref<16x128xf32, #tpu.memory_space<vmem>>, vector<16x128xf32>
    tpu.vector_store %arg4[%c0_11, %c0_12], %32 {strides = array<i32>} : memref<16x128xf32, #tpu.memory_space<vmem>>, vector<16x128xf32>,
    return
  }
  func.func @transform_0(%arg0: i32) -> (i32, i32) {
    %c0_i32 = arith.constant 0 : i32
    %c0_i32_0 = arith.constant 0 : i32
    return %arg0, %c0_i32 : i32, i32
  }
  func.func @transform_1(%arg0: i32) -> (i32, i32) {
    %c0_i32 = arith.constant 0 : i32
    %c0_i32_0 = arith.constant 0 : i32
    %c0_i32_1 = arith.constant 0 : i32
    return %c0_i32, %c0_i32_0 : i32, i32
  }
  func.func @transform_2(%arg0: i32) -> (i32, i32) {
    %c0_i32 = arith.constant 0 : i32
    %c0_i32_0 = arith.constant 0 : i32
    %c0_i32_1 = arith.constant 0 : i32
    return %c0_i32, %c0_i32_0 : i32, i32
  }
  func.func @transform_3(%arg0: i32) -> (i32, i32) {
    %c0_i32 = arith.constant 0 : i32
    %c0_i32_0 = arith.constant 0 : i32
    return %arg0, %c0_i32 : i32, i32
  }
}

</mosaic_0001>

<llo_original>
// kernel: tpu_custom_call.1
$region0: #{tpu_custom_call.1}
  #allocation0 [shape = 'u32[]', space=smem, size = 0x4, offset = 0x4, fixed_abs, tag = 'smem constant byte address 0x4 - core index']
  #allocation1 [shape = 'u32[144,128]{1,0:T(1,128)}', space=vmem, size = 0x12000, scoped, tag = 'internal scratch']
  %s0 = inlined_call_operand.hbm [shape: f32[16,128], index: 0, kind: input, shape index: {}]
  %s1 = inlined_call_operand.vmem [shape: f32[1,128], index: 1, kind: input, shape index: {}]
  %s2 = inlined_call_operand.vmem [shape: f32[1,128], index: 2, kind: input, shape index: {}]
  %s3 = inlined_call_operand.hbm [shape: f32[16,128], index: 3, kind: output, shape index: {}]
  %s4 = sld [smem:[#allocation0]]
  $region26: #{tpu_custom_call.1} parent=0
    _
  %s6 = ssub.s32 1, %s4
  %s7 = scalar_select 0, %s6, %s4
  $region1: #{tpu_custom_call.1} parent=0
    #allocation2 [shape = 'u8[8192]{0}', space=vmem, size = 0x2000, scoped, tag = 'input window, operand 0, single buffered']
    #allocation3 [shape = 's32[1]{0}', space=sflag, size = 0x4, scoped, tag = 'scoped memory for tpu_custom_call.1']
    #allocation4 [shape = 's32[1]{0}', space=sflag, size = 0x4, scoped, tag = 'scoped memory for tpu_custom_call.1']
    #allocation5 [shape = 'u8[8192]{0}', space=vmem, size = 0x2000, scoped, tag = 'output window, operand 0, single buffered']
    %8 = vsyncpa [#allocation3], 0
    %9 = vsyncpa [#allocation4], 0
    // Predicated region
    $region2: #{tpu_custom_call.1} parent=1 // pred_check
      _
    $region3: #{tpu_custom_call.1} parent=1 // pred_check_branch
      %11 = sbr.rel (0) target = $region5
    $region4: #{tpu_custom_call.1} parent=1 // pred_region
      %s13 = ssub.s32 256, 256
      %14 = vsyncadd [#allocation3], %s13
      %s15 = sshll.u32 [#allocation2], 4
      %s16 = int_to_ptr.vmem [resolvable:$true] %s15
      %21 = dma.hbm_to_vmem [thread:$0]  %s0, 256, %s16, [#allocation3], 128, 128, 8
    $region5: #{tpu_custom_call.1} parent=1 // pred_fallthru
      _
    // Predicated region
    $region6: #{tpu_custom_call.1} parent=1 // pred_check
      _
    $region7: #{tpu_custom_call.1} parent=1 // pred_check_branch
      %23 = sbr.rel (0) target = $region9
    $region8: #{tpu_custom_call.1} parent=1 // pred_region
      _
    $region9: #{tpu_custom_call.1} parent=1 // pred_fallthru
      _
    // Predicated region
    $region10: #{tpu_custom_call.1} parent=1 // pred_check
      _
    $region11: #{tpu_custom_call.1} parent=1 // pred_check_branch
      %25 = sbr.rel (0) target = $region13
    $region12: #{tpu_custom_call.1} parent=1 // pred_region
      _
    $region13: #{tpu_custom_call.1} parent=1 // pred_fallthru
      _
    // Predicated region
    $region14: #{tpu_custom_call.1} parent=1 // pred_check
      _
    $region15: #{tpu_custom_call.1} parent=1 // pred_check_branch
      %27 = sbr.rel (0) target = $region17
    $region16: #{tpu_custom_call.1} parent=1 // pred_region
      %28 = dma.done [#allocation3], 256
    $region17: #{tpu_custom_call.1} parent=1 // pred_fallthru
      _
    %v29 = vld [vmem:[#allocation2] sm:$0xff]
    %v30 = vld [vmem:[#allocation2 + $0x8] sm:$0xff]
    %v31 = vlaneseq
    %v32 = vand.u32 %v31, 127
    %vm33 = vcmp.lt.s32.totalorder %v32, 32
    %v34 = vsel %vm33, %v29, 0.0
    %v35 = vsel %vm33, %v30, 0.0
    %36 = vadd.xlane.f32.xlu0 %v34
    %v37 = vpop.xlane.xlu0 %36
    %38 = vadd.xlane.f32.xlu0 %v35
    %v39 = vpop.xlane.xlu0 %38
    %v40 = vmul.f32 %v34, %v34
    %v41 = vmul.f32 %v35, %v35
    %42 = vadd.xlane.f32.xlu0 %v40
    %v43 = vpop.xlane.xlu0 %42
    %44 = vadd.xlane.f32.xlu0 %v41
    %v45 = vpop.xlane.xlu0 %44
    %v46 = vmul.f32 %v37, 0.03125
    %v47 = vmul.f32 %v39, 0.03125
    %v48 = vmul.f32 %v37, %v46
    %v49 = vmul.f32 %v39, %v47
    %v50 = vsub.f32 %v43, %v48
    %v51 = vsub.f32 %v45, %v49
    %v52 = vmul.f32 %v50, 0.032258064
    %v53 = vmul.f32 %v51, 0.032258064
    %v54 = vmax.f32 %v52, 0.0
    %v55 = vmax.f32 %v53, 0.0
    %v56 = vrsqrt.pop %v54
    %v57 = vmul.f32 %v54, %v56
    %vm58 = vcmp.eq.f32.partialorder %v54, inf
    %v59 = vsel %vm58, %v54, %v57
    %vm60 = vcmp.eq.f32.partialorder %v54, 0.0
    %v61 = vand.u32 %v54, 2147483648
    %v62 = vsel %vm60, %v61, %v59
    %v63 = vrsqrt.pop %v55
    %v64 = vmul.f32 %v55, %v63
    %vm65 = vcmp.eq.f32.partialorder %v55, inf
    %v66 = vsel %vm65, %v55, %v64
    %vm67 = vcmp.eq.f32.partialorder %v55, 0.0
    %v68 = vand.u32 %v55, 2147483648
    %v69 = vsel %vm67, %v68, %v66
    %v70 = vadd.f32 %v62, 1e-06
    %v71 = vadd.f32 %v69, 1e-06
    %v72 = vrcp.pop %v70
    %v73 = vrcp.pop %v71
    %v74 = vsub.f32 %v29, %v46
    %v75 = vsub.f32 %v30, %v47
    %v76 = vmul.f32 %v74, %v72
    %v77 = vmul.f32 %v75, %v73
    %v78 = vld [vmem:[%s1] sm:$0x1]
    %v80 = vlaneseq
    %v81 = vshrl.u32 %v80, 7
    %v82 = vsub.s32 0, %v81
    %v83 = vrot.slane %v78, %v82
    %v85 = vmul.f32 %v76, %v83
    %v86 = vmul.f32 %v77, %v83
    %v87 = vld [vmem:[%s2] sm:$0x1]
    %v89 = vlaneseq
    %v90 = vshrl.u32 %v89, 7
    %v91 = vsub.s32 0, %v90
    %v92 = vrot.slane %v87, %v91
    %v94 = vadd.f32 %v85, %v92
    %v95 = vadd.f32 %v86, %v92
    %96 = vst [vmem:[#allocation5] sm:$0xff] %v94
    %97 = vst [vmem:[#allocation5 + $0x8] sm:$0xff] %v95
    // Predicated region
    $region18: #{tpu_custom_call.1} parent=1 // pred_check
      _
    $region19: #{tpu_custom_call.1} parent=1 // pred_check_branch
      %99 = sbr.rel (0) target = $region21
    $region20: #{tpu_custom_call.1} parent=1 // pred_region
      %s101 = ssub.s32 256, 256
      %102 = vsyncadd [#allocation4], %s101
      %s103 = sshll.u32 [#allocation5], 4
      %s104 = int_to_ptr.vmem [resolvable:$true] %s103
      %109 = dma.vmem_to_hbm [thread:$0]  %s104, 256, %s3, [#allocation4], 128, 128, 8
    $region21: #{tpu_custom_call.1} parent=1 // pred_fallthru
      _
    // Predicated region
    $region22: #{tpu_custom_call.1} parent=1 // pred_check
      _
    $region23: #{tpu_custom_call.1} parent=1 // pred_check_branch
      %111 = sbr.rel (0) target = $region25
    $region24: #{tpu_custom_call.1} parent=1 // pred_region
      %112 = dma.done [#allocation4], 256
    $region25: #{tpu_custom_call.1} parent=1 // pred_fallthru
      _
    %113 = vsyncpa [#allocation3], 1
    %114 = vsyncpa [#allocation4], 1

</llo_original>
